<compile_context>
chip_gen: v5e
topology: v5e:2x2
jax: 0.10.0
libtpu: 0.0.40
codegen_flags: <defaults>
</compile_context>

<pallas_src>
import functools

import jax
import jax.numpy as jnp
from jax.experimental import pallas as pl
from jax.experimental.pallas import tpu as pltpu

EPSILON = 1e-07
LANES = 128
SUBLANES = 8
CHUNK = LANES * SUBLANES                    # 1024-element pad granularity
TARGET_TILE_BYTES = 1 << 20                 # ~1 MiB per input buffer per step


# ----------------------------- reduced ('mean' / 'sum') ----------------------
def _rmse_reduce_kernel(pred_ref, actual_ref, out_ref, acc_ref, *,
                        rows, tile_rows, n_elements, reduction):
    i = pl.program_id(0)

    @pl.when(i == 0)
    def _():
        acc_ref[...] = jnp.zeros_like(acc_ref)

    d = pred_ref[...].astype(jnp.float32) - actual_ref[...].astype(jnp.float32)
    sq = d * d

    # Mask out-of-bounds rows of a ragged last block (static no-op when the
    # grid divides evenly).  Zero-padded tail elements already contribute 0.
    if rows % tile_rows != 0:
        row_ids = i * tile_rows + jax.lax.broadcasted_iota(
            jnp.int32, (tile_rows, LANES), 0)
        sq = jnp.where(row_ids < rows, sq, 0.0)

    # Pure VPU element-wise accumulate; fully hidden under the input DMA.
    acc_ref[...] = acc_ref[...] + sq

    @pl.when(i == pl.num_programs(0) - 1)
    def _():
        total = jnp.sum(acc_ref[...])            # single cross-lane reduce
        if reduction == "mean":
            total = total / jnp.float32(n_elements)
        out_ref[...] = jnp.sqrt(total + jnp.float32(EPSILON))[None, None]


# ----------------------------- elementwise ('none') ---------------------------
def _rmse_elementwise_kernel(pred_ref, actual_ref, out_ref):
    d = pred_ref[...].astype(jnp.float32) - actual_ref[...].astype(jnp.float32)
    out_ref[...] = jnp.sqrt(d * d + jnp.float32(EPSILON)).astype(out_ref.dtype)


# ----------------------------- wrapper ----------------------------------------
def _to_slab(x):
    """Flatten to (rows, 128) in the NATIVE dtype; pad only when needed."""
    n = x.size
    flat = x.reshape(-1)
    padded = pl.cdiv(n, CHUNK) * CHUNK
    if padded != n:                      # static decision; skipped when aligned
        flat = jnp.pad(flat, (0, padded - n))
    return flat.reshape(padded // LANES, LANES), n


def _pick_tile_rows(rows, dtype):
    """Dtype-aware tile: ~1 MiB of HBM per input buffer per grid step."""
    bytes_per_row = LANES * jnp.dtype(dtype).itemsize
    cap = max(SUBLANES, (TARGET_TILE_BYTES // bytes_per_row) // SUBLANES * SUBLANES)
    return min(cap, rows)                # both multiples of 8


def rmse_loss(pred, actual, reduction="mean"):
    assert pred.shape == actual.shape, "pred/actual shape mismatch"
    p2, n = _to_slab(pred)
    a2, _ = _to_slab(actual)
    rows = p2.shape[0]                               # multiple of 8
    tile_rows = _pick_tile_rows(rows, pred.dtype)    # multiple of 8
    grid = (pl.cdiv(rows, tile_rows),)

    in_specs = [
        pl.BlockSpec((tile_rows, LANES), lambda i: (i, 0)),
        pl.BlockSpec((tile_rows, LANES), lambda i: (i, 0)),
    ]

    if reduction in ("mean", "sum"):
        kernel = functools.partial(
            _rmse_reduce_kernel, rows=rows, tile_rows=tile_rows,
            n_elements=n, reduction=reduction)
        out = pl.pallas_call(
            kernel,
            out_shape=jax.ShapeDtypeStruct((1, 1), jnp.float32),
            grid_spec=pltpu.PrefetchScalarGridSpec(
                num_scalar_prefetch=0,
                grid=grid,
                in_specs=in_specs,
                out_specs=pl.BlockSpec((1, 1), lambda i: (0, 0)),
                scratch_shapes=[pltpu.VMEM((tile_rows, LANES), jnp.float32)],
            ),
            compiler_params=pltpu.CompilerParams(
                dimension_semantics=("arbitrary",)),
        )(p2, a2)
        return out[0, 0].astype(pred.dtype)

    elif reduction == "none":
        out = pl.pallas_call(
            _rmse_elementwise_kernel,
            out_shape=jax.ShapeDtypeStruct((rows, LANES), pred.dtype),
            grid_spec=pltpu.PrefetchScalarGridSpec(
                num_scalar_prefetch=0,
                grid=grid,
                in_specs=in_specs,
                out_specs=pl.BlockSpec((tile_rows, LANES), lambda i: (i, 0)),
            ),
            compiler_params=pltpu.CompilerParams(
                dimension_semantics=("parallel",)),
        )(p2, a2)
        if rows * LANES != n:                        # only slice if we padded
            out = out.reshape(-1)[:n]
        return out.reshape(pred.shape)

    else:
        raise ValueError(f"unsupported reduction: {reduction}")


if __name__ == "__main__":
    key = jax.random.PRNGKey(0)
    k1, k2, k3, k4 = jax.random.split(key, 4)

    # Small NCHW-like inputs: batch=2, channels=4, spatial=16x16.
    pred = jax.random.normal(k1, (2, 4, 16, 16), dtype=jnp.float32)
    actual = jax.random.normal(k2, (2, 4, 16, 16), dtype=jnp.float32)

    # reduction='mean' (default torch behaviour)
    rmse_mean = jax.block_until_ready(rmse_loss(pred, actual, reduction="mean"))
    ref_mean = jnp.sqrt(jnp.mean((pred - actual) ** 2) + EPSILON)
    assert jnp.allclose(rmse_mean, ref_mean, rtol=1e-5, atol=1e-6), (
        rmse_mean, ref_mean)

    # reduction='sum'
    rmse_sum = jax.block_until_ready(rmse_loss(pred, actual, reduction="sum"))
    ref_sum = jnp.sqrt(jnp.sum((pred - actual) ** 2) + EPSILON)
    assert jnp.allclose(rmse_sum, ref_sum, rtol=1e-5, atol=1e-5), (
        rmse_sum, ref_sum)

    # reduction='none' (elementwise)
    rmse_none = jax.block_until_ready(rmse_loss(pred, actual, reduction="none"))
    ref_none = jnp.sqrt((pred - actual) ** 2 + EPSILON)
    assert rmse_none.shape == pred.shape
    assert jnp.allclose(rmse_none, ref_none, rtol=1e-5, atol=1e-6)

    # Ragged / multi-step sanity checks (exercise padding and the in-kernel
    # row mask for a non-dividing last grid block).
    p_r = jax.random.normal(k3, (3, 5, 7), dtype=jnp.float32)        # pad path
    a_r = jax.random.normal(k4, (3, 5, 7), dtype=jnp.float32)
    got = jax.block_until_ready(rmse_loss(p_r, a_r, reduction="mean"))
    ref = jnp.sqrt(jnp.mean((p_r - a_r) ** 2) + EPSILON)
    assert jnp.allclose(got, ref, rtol=1e-5, atol=1e-6), (got, ref)

    p_big = jax.random.normal(k3, (2100, 128), dtype=jnp.float32)    # ragged blk
    a_big = jax.random.normal(k4, (2100, 128), dtype=jnp.float32)
    got_b = jax.block_until_ready(rmse_loss(p_big, a_big, reduction="mean"))
    ref_b = jnp.sqrt(jnp.mean((p_big - a_big) ** 2) + EPSILON)
    assert jnp.allclose(got_b, ref_b, rtol=1e-5, atol=1e-6), (got_b, ref_b)

    print("KERNEL_OK")
</pallas_src>

<mosaic_0001>
module attributes {stable_mosaic.version = 11 : i64} {
  func.func @_rmse_reduce_kernel(%arg0: i32, %arg1: memref<16x128xf32, #tpu.memory_space<vmem>>, %arg2: memref<16x128xf32, #tpu.memory_space<vmem>>, %arg3: memref<1x1xf32, #tpu.memory_space<vmem>>, %arg4: memref<16x128xf32, #tpu.memory_space<vmem>>) attributes {dimension_semantics = [#tpu.dimension_semantics<arbitrary>], iteration_bounds = array<i64: 1>, scalar_prefetch = 0 : i64, scratch_operands = 1 : i64, tpu.core_type = #tpu.core_type<tc>, window_params = [{transform_indices = @transform_0, window_bounds = array<i64: 16, 128>}, {transform_indices = @transform_1, window_bounds = array<i64: 16, 128>}, {pipeline_mode = #tpu.pipeline_mode<synchronous>, transform_indices = @transform_2, window_bounds = array<i64: 1, 1>}]} {
    %c0_i32 = arith.constant 0 : i32
    %0 = arith.cmpi eq, %arg0, %c0_i32 : i32
    %1 = arith.extui %0 : i1 to i32
    %c0_i32_0 = arith.constant 0 : i32
    %2 = arith.cmpi ne, %1, %c0_i32_0 : i32
    scf.if %2 {
      %cst = arith.constant 0.000000e+00 : f32
      %13 = vector.broadcast %cst : f32 to vector<16x128xf32>
      %c0_10 = arith.constant 0 : index
      %c0_11 = arith.constant 0 : index
      %14 = vector.load %arg4[%c0_10, %c0_11] : memref<16x128xf32, #tpu.memory_space<vmem>>, vector<16x128xf32>
      tpu.vector_store %arg4[%c0_10, %c0_11], %13 {strides = array<i32>} : memref<16x128xf32, #tpu.memory_space<vmem>>, vector<16x128xf32>,
    } else {
    }
    %c0 = arith.constant 0 : index
    %c0_1 = arith.constant 0 : index
    %3 = vector.load %arg1[%c0, %c0_1] : memref<16x128xf32, #tpu.memory_space<vmem>>, vector<16x128xf32>
    %c0_2 = arith.constant 0 : index
    %c0_3 = arith.constant 0 : index
    %4 = vector.load %arg2[%c0_2, %c0_3] : memref<16x128xf32, #tpu.memory_space<vmem>>, vector<16x128xf32>
    %5 = arith.subf %3, %4 : vector<16x128xf32>
    %6 = arith.mulf %5, %5 : vector<16x128xf32>
    %c0_4 = arith.constant 0 : index
    %c0_5 = arith.constant 0 : index
    %7 = vector.load %arg4[%c0_4, %c0_5] : memref<16x128xf32, #tpu.memory_space<vmem>>, vector<16x128xf32>
    %8 = arith.addf %7, %6 : vector<16x128xf32>
    %c0_6 = arith.constant 0 : index
    %c0_7 = arith.constant 0 : index
    %9 = vector.load %arg4[%c0_6, %c0_7] : memref<16x128xf32, #tpu.memory_space<vmem>>, vector<16x128xf32>
    tpu.vector_store %arg4[%c0_6, %c0_7], %8 {strides = array<i32>} : memref<16x128xf32, #tpu.memory_space<vmem>>, vector<16x128xf32>,
    %c0_i32_8 = arith.constant 0 : i32
    %10 = arith.cmpi eq, %arg0, %c0_i32_8 : i32
    %11 = arith.extui %10 : i1 to i32
    %c0_i32_9 = arith.constant 0 : i32
    %12 = arith.cmpi ne, %11, %c0_i32_9 : i32
    scf.if %12 {
      %c0_10 = arith.constant 0 : index
      %c0_11 = arith.constant 0 : index
      %13 = vector.load %arg4[%c0_10, %c0_11] : memref<16x128xf32, #tpu.memory_space<vmem>>, vector<16x128xf32>
      %14 = vector.shape_cast %13 : vector<16x128xf32> to vector<1x16x128xf32>
      %cst = arith.constant dense<0.000000e+00> : vector<1xf32>
      %15 = vector.multi_reduction <add>, %14, %cst [1, 2] : vector<1x16x128xf32> to vector<1xf32>
      %16 = vector.shape_cast %15 : vector<1xf32> to vector<1x1x1xf32>
      %17 = vector.extract %16[0, 0, 0] : f32 from vector<1x1x1xf32>
      %cst_12 = arith.constant 2.048000e+03 : f32
      %18 = arith.divf %17, %cst_12 : f32
      %cst_13 = arith.constant 1.000000e-07 : f32
      %19 = arith.addf %18, %cst_13 : f32
      %20 = math.sqrt %19 : f32
      %21 = vector.broadcast %20 : f32 to vector<1x1xf32>
      %c0_14 = arith.constant 0 : index
      %c0_15 = arith.constant 0 : index
      %22 = vector.load %arg3[%c0_14, %c0_15] : memref<1x1xf32, #tpu.memory_space<vmem>>, vector<1x1xf32>
      tpu.vector_store %arg3[%c0_14, %c0_15], %21 {strides = array<i32>} : memref<1x1xf32, #tpu.memory_space<vmem>>, vector<1x1xf32>,
    } else {
    }
    return
  }
  func.func @transform_0(%arg0: i32) -> (i32, i32) {
    %c0_i32 = arith.constant 0 : i32
    %c0_i32_0 = arith.constant 0 : i32
    return %arg0, %c0_i32 : i32, i32
  }
  func.func @transform_1(%arg0: i32) -> (i32, i32) {
    %c0_i32 = arith.constant 0 : i32
    %c0_i32_0 = arith.constant 0 : i32
    return %arg0, %c0_i32 : i32, i32
  }
  func.func @transform_2(%arg0: i32) -> (i32, i32) {
    %c0_i32 = arith.constant 0 : i32
    %c0_i32_0 = arith.constant 0 : i32
    %c0_i32_1 = arith.constant 0 : i32
    return %c0_i32, %c0_i32_0 : i32, i32
  }
}

</mosaic_0001>

<llo_original>
// kernel: tpu_custom_call.1
$region0: #{tpu_custom_call.1}
  #allocation0 [shape = 'u32[]', space=smem, size = 0x4, offset = 0x4, fixed_abs, tag = 'smem constant byte address 0x4 - core index']
  #allocation1 [shape = 'u32[72,128]{1,0:T(1,128)}', space=vmem, size = 0x9000, scoped, tag = 'internal scratch']
  #allocation2 [shape = 'f32[16,128]{1,0:T(8,128)}', space=vmem, size = 0x2000, scoped, tag = 'scratch operand']
  %s0 = inlined_call_operand.hbm [shape: f32[16,128], index: 0, kind: input, shape index: {}]
  %s1 = inlined_call_operand.hbm [shape: f32[16,128], index: 1, kind: input, shape index: {}]
  %s2 = inlined_call_operand.hbm [shape: f32[1,1], index: 2, kind: output, shape index: {}]
  %s3 = sld [smem:[#allocation0]]
  $region34: #{tpu_custom_call.1} parent=0
    _
  %s5 = ssub.s32 1, %s3
  %s6 = scalar_select 0, %s5, %s3
  $region1: #{tpu_custom_call.1} parent=0
    #allocation3 [shape = 'u8[8192]{0}', space=vmem, size = 0x2000, scoped, tag = 'input window, operand 0, single buffered']
    #allocation4 [shape = 's32[1]{0}', space=sflag, size = 0x4, scoped, tag = 'scoped memory for tpu_custom_call.1']
    #allocation5 [shape = 's32[1]{0}', space=sflag, size = 0x4, scoped, tag = 'scoped memory for tpu_custom_call.1']
    #allocation6 [shape = 'u8[8192]{0}', space=vmem, size = 0x2000, scoped, tag = 'input window, operand 1, single buffered']
    #allocation7 [shape = 's32[1]{0}', space=sflag, size = 0x4, scoped, tag = 'scoped memory for tpu_custom_call.1']
    #allocation8 [shape = 'u8[512]{0}', space=vmem, size = 0x400, scoped, tag = 'output window, operand 0, single buffered']
    %7 = vsyncpa [#allocation4], 0
    %8 = vsyncpa [#allocation7], 0
    %9 = vsyncpa [#allocation5], 0
    // Predicated region
    $region2: #{tpu_custom_call.1} parent=1 // pred_check
      _
    $region3: #{tpu_custom_call.1} parent=1 // pred_check_branch
      %11 = sbr.rel (0) target = $region5
    $region4: #{tpu_custom_call.1} parent=1 // pred_region
      %13 = vsyncadd [#allocation4], 0
      %s14 = sshll.u32 %s0, 4
      %s15 = int_to_ptr.hbm [resolvable:$true] %s14
      %s16 = sshll.u32 [#allocation3], 4
      %s17 = int_to_ptr.vmem [resolvable:$true] %s16
      %22 = dma.hbm_to_vmem [thread:$0]  %s15, 256, %s17, [#allocation4], 128, 128, 8
    $region5: #{tpu_custom_call.1} parent=1 // pred_fallthru
      _
    // Predicated region
    $region6: #{tpu_custom_call.1} parent=1 // pred_check
      _
    $region7: #{tpu_custom_call.1} parent=1 // pred_check_branch
      %24 = sbr.rel (0) target = $region9
    $region8: #{tpu_custom_call.1} parent=1 // pred_region
      %26 = vsyncadd [#allocation7], 0
      %s27 = sshll.u32 %s1, 4
      %s28 = int_to_ptr.hbm [resolvable:$true] %s27
      %s29 = sshll.u32 [#allocation6], 4
      %s30 = int_to_ptr.vmem [resolvable:$true] %s29
      %35 = dma.hbm_to_vmem [thread:$0]  %s28, 256, %s30, [#allocation7], 128, 128, 8
    $region9: #{tpu_custom_call.1} parent=1 // pred_fallthru
      _
    // Predicated region
    $region10: #{tpu_custom_call.1} parent=1 // pred_check
      _
    $region11: #{tpu_custom_call.1} parent=1 // pred_check_branch
      %37 = sbr.rel (0) target = $region13
    $region12: #{tpu_custom_call.1} parent=1 // pred_region
      %39 = dma.done [#allocation4], 256
    $region13: #{tpu_custom_call.1} parent=1 // pred_fallthru
      _
    // Predicated region
    $region14: #{tpu_custom_call.1} parent=1 // pred_check
      _
    $region15: #{tpu_custom_call.1} parent=1 // pred_check_branch
      %41 = sbr.rel (0) target = $region17
    $region16: #{tpu_custom_call.1} parent=1 // pred_region
      %43 = dma.done [#allocation7], 256
    $region17: #{tpu_custom_call.1} parent=1 // pred_fallthru
      _
    %p44 = scmp.eq.s32.totalorder 0, 0
    // Predicated region
    $region18: #{tpu_custom_call.1} parent=1 // pred_check
      %p45 = pneg %p44
    $region19: #{tpu_custom_call.1} parent=1 // pred_check_branch
      %47 = sbr.rel (%p45) target = $region21
    $region20: #{tpu_custom_call.1} parent=1 // pred_region
      %48 = vst [vmem:[#allocation2] sm:$0xff] 0.0
      %49 = vst [vmem:[#allocation2 + $0x8] sm:$0xff] 0.0
    $region21: #{tpu_custom_call.1} parent=1 // pred_fallthru
      _
    %v50 = vld [vmem:[#allocation3] sm:$0xff]
    %v51 = vld [vmem:[#allocation3 + $0x8] sm:$0xff]
    %v52 = vld [vmem:[#allocation6] sm:$0xff]
    %v53 = vld [vmem:[#allocation6 + $0x8] sm:$0xff]
    %v54 = vsub.f32 %v50, %v52
    %v55 = vsub.f32 %v51, %v53
    %v56 = vmul.f32 %v54, %v54
    %v57 = vmul.f32 %v55, %v55
    %v58 = vld [vmem:[#allocation2] sm:$0xff]
    %v59 = vld [vmem:[#allocation2 + $0x8] sm:$0xff]
    %v60 = vadd.f32 %v58, %v56
    %v61 = vadd.f32 %v59, %v57
    %62 = vst [vmem:[#allocation2] sm:$0xff] %v60
    %63 = vst [vmem:[#allocation2 + $0x8] sm:$0xff] %v61
    // Predicated region
    $region22: #{tpu_custom_call.1} parent=1 // pred_check
      %p64 = pneg %p44
    $region23: #{tpu_custom_call.1} parent=1 // pred_check_branch
      %66 = sbr.rel (%p64) target = $region25
    $region24: #{tpu_custom_call.1} parent=1 // pred_region
      %v67 = vld [vmem:[#allocation2] sm:$0xff]
      %v68 = vld [vmem:[#allocation2 + $0x8] sm:$0xff]
      %v69 = vadd.f32 %v67, %v68
      %70 = vadd.xlane.f32.xlu0 %v69
      %v71 = vpop.xlane.xlu0 %70
      %v72 = vrot.slane %v71, 4
      %v73 = vadd.f32 %v71, %v72
      %v74 = vrot.slane %v73, 2
      %v75 = vadd.f32 %v73, %v74
      %v76 = vrot.slane %v75, 1
      %v77 = vadd.f32 %v75, %v76
      %s78 = vtos %v77
      %v79 = vrcp.pop 2048.0
      %v80 = vmul.f32 2048.0, %v79
      %v81 = vsub.f32 1.0, %v80
      %v82 = vmul.f32 %v79, %v81
      %v83 = vadd.f32 %v79, %v82
      %vm84 = vweird.f32 %v79
      %v85 = vsel %vm84, %v79, %v83
      %s86 = vtos %v85
      %s87 = smul.f32 %s78, %s86
      %s88 = sadd.f32 %s87, 1e-07
      %v89 = vstv %s88
      %v90 = vrsqrt.pop %v89
      %v91 = vmul.f32 %v90, %v89
      %v92 = vmul.f32 %v91, %v90
      %v93 = vmul.f32 0.5, %v92
      %v94 = vsub.f32 1.5, %v93
      %v95 = vmul.f32 %v90, %v94
      %v96 = vmul.f32 %v89, %v95
      %vm97 = vcmp.eq.f32.partialorder %v89, inf
      %v98 = vsel %vm97, %v89, %v96
      %vm99 = vcmp.eq.f32.partialorder %v89, 0.0
      %v100 = vand.u32 %v89, 2147483648
      %v101 = vsel %vm99, %v100, %v98
      %s102 = vtos %v101
      %v103 = vstv %s102
      %vm104 = vcmask 0
      %105 = vst.msk [vmem:[#allocation8] sm:$0x1] %vm104, %v103
    $region25: #{tpu_custom_call.1} parent=1 // pred_fallthru
      _
    // Predicated region
    $region26: #{tpu_custom_call.1} parent=1 // pred_check
      _
    $region27: #{tpu_custom_call.1} parent=1 // pred_check_branch
      %107 = sbr.rel (0) target = $region29
    $region28: #{tpu_custom_call.1} parent=1 // pred_region
      %109 = vsyncadd [#allocation5], 0
      %s111 = sshll.u32 [#allocation8], 4
      %s112 = int_to_ptr.vmem [resolvable:$true] %s111
      %s113 = sshll.u32 %s2, 4
      %s114 = int_to_ptr.hbm [resolvable:$true] %s113
      %116 = dma.vmem_to_hbm [thread:$0]  %s112, 16, %s114, [#allocation5]
    $region29: #{tpu_custom_call.1} parent=1 // pred_fallthru
      _
    // Predicated region
    $region30: #{tpu_custom_call.1} parent=1 // pred_check
      _
    $region31: #{tpu_custom_call.1} parent=1 // pred_check_branch
      %118 = sbr.rel (0) target = $region33
    $region32: #{tpu_custom_call.1} parent=1 // pred_region
      %120 = dma.done [#allocation5], 16
    $region33: #{tpu_custom_call.1} parent=1 // pred_fallthru
      _
    %121 = vsyncpa [#allocation4], 1
    %122 = vsyncpa [#allocation7], 1
    %123 = vsyncpa [#allocation5], 1

</llo_original>
